<compile_context>
chip_gen: v7x
topology: tpu7x:2x2x1
jax: 0.10.0
libtpu: 0.0.40
codegen_flags: <defaults>
</compile_context>

<pallas_src>
import functools

import jax
import jax.numpy as jnp
from jax import lax
from jax.experimental import pallas as pl
from jax.experimental.pallas import tpu as pltpu

EPS = 1e-5  # nn.BatchNorm2d default eps


# ---------------------------------------------------------------------------
# Pass 1: conv tile (MXU matmul) + global per-channel sum / sumsq accumulation
# ---------------------------------------------------------------------------
def _conv_stats_kernel(w_ref, p_ref, y_ref, sum_ref, ssq_ref):
    # w_ref  : (Cout, K)        conv weight, (dy, dx, cin)-ordered columns
    # p_ref  : (K, TILE_HW)     im2col patch tile (leading image dim squeezed)
    # y_ref  : (Cout, TILE_HW)  conv output tile (f32)
    # sum_ref: (Cout, 1)        global sum accumulator   (resident block)
    # ssq_ref: (Cout, 1)        global sumsq accumulator (resident block)
    @pl.when((pl.program_id(0) == 0) & (pl.program_id(1) == 0))
    def _init():
        sum_ref[...] = jnp.zeros_like(sum_ref)
        ssq_ref[...] = jnp.zeros_like(ssq_ref)

    y = jnp.dot(w_ref[...], p_ref[...], preferred_element_type=jnp.float32)
    y_ref[...] = y
    sum_ref[...] += jnp.sum(y, axis=1, keepdims=True)
    ssq_ref[...] += jnp.sum(y * y, axis=1, keepdims=True)


# ---------------------------------------------------------------------------
# Pass 2: folded BatchNorm affine + ELU, written in place over the conv buffer
# ---------------------------------------------------------------------------
def _bn_elu_kernel(scale_ref, shift_ref, y_ref, o_ref):
    # scale_ref/shift_ref: (Cout, 1); y_ref/o_ref: (Cout, TILE_HW)
    z = y_ref[...] * scale_ref[...] + shift_ref[...]
    neg = jnp.exp(jnp.minimum(z, 0.0)) - 1.0     # EUP; clamp avoids dead-branch inf
    o_ref[...] = jnp.where(z > 0.0, z, neg)


# ---------------------------------------------------------------------------
# Glue
# ---------------------------------------------------------------------------
def _pick_tile_hw(hwo, cap):
    """Largest lane-dense tile that divides Ho*Wo (<= cap), else full Ho*Wo."""
    if hwo <= cap:
        return hwo
    t = (cap // 128) * 128
    while t >= 128:
        if hwo % t == 0:
            return t
        t -= 128
    return hwo


def _im2col(x_nhwc, ksize, stride):
    """Return (N, K, Ho*Wo) patches with K ordered (dy, dx, cin)."""
    n, h, w, c = x_nhwc.shape
    p = (ksize - 1) // 2
    xp = jnp.pad(x_nhwc, ((0, 0), (p, p), (p, p), (0, 0)))
    ho = (h + 2 * p - ksize) // stride + 1
    wo = (w + 2 * p - ksize) // stride + 1
    taps = []
    for dy in range(ksize):
        for dx in range(ksize):
            taps.append(xp[:, dy:dy + stride * ho:stride,
                           dx:dx + stride * wo:stride, :])
    pat = jnp.stack(taps, axis=1)                       # (N, k*k, Ho, Wo, C)
    pat = jnp.transpose(pat, (0, 1, 4, 2, 3))           # (N, k*k, C, Ho, Wo)
    return pat.reshape(n, ksize * ksize * c, ho * wo), ho, wo


@functools.partial(jax.jit, static_argnames=("kernel_size", "stride",
                                             "compute_dtype", "tile_hw_cap"))
def conv_forward(x_nchw, w_oihw, bias, gamma, beta, *, kernel_size, stride,
                 compute_dtype=jnp.float32, tile_hw_cap=512):
    # tile_hw_cap: size per generation for real shapes (512-2048 on v5e/v6e,
    # ~1024 on v7x given 64 MiB VMEM).  Demo uses a small cap to exercise the
    # multi-tile stats accumulation.
    n, cin, h, w = x_nchw.shape
    cout = w_oihw.shape[0]
    del bias  # cancels exactly under training-mode BN (batch-mean subtraction)

    x_nhwc = jnp.transpose(x_nchw, (0, 2, 3, 1)).astype(jnp.float32)
    patches, ho, wo = _im2col(x_nhwc, kernel_size, stride)
    patches = patches.astype(compute_dtype)
    k2cin = kernel_size * kernel_size * cin
    hwo = ho * wo
    tile_hw = _pick_tile_hw(hwo, tile_hw_cap)
    hw_tiles = hwo // tile_hw

    # Weight -> (Cout, K) matching the (dy, dx, cin) patch-column order.
    w_mat = jnp.transpose(w_oihw, (0, 2, 3, 1)).reshape(cout, k2cin)
    w_mat = w_mat.astype(compute_dtype)

    # ---- pass 1: conv tiles + global batch stats --------------------------
    y, ysum, yssq = pl.pallas_call(
        _conv_stats_kernel,
        out_shape=(
            jax.ShapeDtypeStruct((n, cout, hwo), jnp.float32),
            jax.ShapeDtypeStruct((cout, 1), jnp.float32),
            jax.ShapeDtypeStruct((cout, 1), jnp.float32),
        ),
        grid=(n, hw_tiles),
        in_specs=[
            pl.BlockSpec((cout, k2cin), lambda i, j: (0, 0)),
            pl.BlockSpec((None, k2cin, tile_hw), lambda i, j: (i, 0, j)),
        ],
        out_specs=(
            pl.BlockSpec((None, cout, tile_hw), lambda i, j: (i, 0, j)),
            pl.BlockSpec((cout, 1), lambda i, j: (0, 0)),
            pl.BlockSpec((cout, 1), lambda i, j: (0, 0)),
        ),
        compiler_params=pltpu.CompilerParams(
            dimension_semantics=("arbitrary", "arbitrary")),
    )(w_mat, patches)

    # ---- fold batch stats + affine (tiny per-channel math, plain JAX) -----
    m_true = float(n * hwo)
    mean = ysum[:, 0] / m_true
    var = jnp.maximum(yssq[:, 0] / m_true - mean * mean, 0.0)   # biased var
    scale = gamma.astype(jnp.float32) * lax.rsqrt(var + EPS)
    shift = beta.astype(jnp.float32) - mean * scale
    scale = scale.reshape(cout, 1)
    shift = shift.reshape(cout, 1)

    # ---- pass 2: (y*scale + shift) + ELU, in place, NCHW-ordered blocks ---
    out = pl.pallas_call(
        _bn_elu_kernel,
        out_shape=jax.ShapeDtypeStruct((n, cout, hwo), jnp.float32),
        grid=(n, hw_tiles),
        in_specs=[
            pl.BlockSpec((cout, 1), lambda i, j: (0, 0)),
            pl.BlockSpec((cout, 1), lambda i, j: (0, 0)),
            pl.BlockSpec((None, cout, tile_hw), lambda i, j: (i, 0, j)),
        ],
        out_specs=pl.BlockSpec((None, cout, tile_hw), lambda i, j: (i, 0, j)),
        input_output_aliases={2: 0},   # reuse the conv buffer in place
        compiler_params=pltpu.CompilerParams(
            dimension_semantics=("parallel", "parallel")),
    )(scale, shift, y)

    return out.reshape(n, cout, ho, wo)   # contiguous reshape only, no transpose


# ---------------------------------------------------------------------------
# Pure-JAX reference (correctness check only)
# ---------------------------------------------------------------------------
def _ref_forward(x, w, bias, gamma, beta, kernel_size, stride):
    p = (kernel_size - 1) // 2
    dn = ("NCHW", "OIHW", "NCHW")
    y = lax.conv_general_dilated(x, w, (stride, stride), ((p, p), (p, p)),
                                 dimension_numbers=dn,
                                 precision=lax.Precision.HIGHEST)
    y = y + bias.reshape(1, -1, 1, 1)
    mean = y.mean(axis=(0, 2, 3), keepdims=True)
    var = ((y - mean) ** 2).mean(axis=(0, 2, 3), keepdims=True)
    y = (y - mean) / jnp.sqrt(var + EPS)
    y = y * gamma.reshape(1, -1, 1, 1) + beta.reshape(1, -1, 1, 1)
    return jnp.where(y > 0.0, y, jnp.expm1(y))   # ELU, alpha=1


if __name__ == "__main__":
    key = jax.random.PRNGKey(0)
    ks = jax.random.split(key, 5)

    N, CIN, H, W = 2, 4, 16, 16
    COUT, KSIZE = 4, 3

    x = jax.random.normal(ks[0], (N, CIN, H, W), jnp.float32)
    wgt = 0.1 * jax.random.normal(ks[1], (COUT, CIN, KSIZE, KSIZE), jnp.float32)
    b = 0.1 * jax.random.normal(ks[2], (COUT,), jnp.float32)
    gamma = 1.0 + 0.1 * jax.random.normal(ks[3], (COUT,), jnp.float32)
    beta = 0.1 * jax.random.normal(ks[4], (COUT,), jnp.float32)

    # Strict f32 check; small tile cap exercises multi-tile stat accumulation.
    for stride in (1, 2):
        out = conv_forward(x, wgt, b, gamma, beta, kernel_size=KSIZE,
                           stride=stride, compute_dtype=jnp.float32,
                           tile_hw_cap=128)
        out = jax.block_until_ready(out)
        ref = _ref_forward(x, wgt, b, gamma, beta, KSIZE, stride)
        assert out.shape == ref.shape, (out.shape, ref.shape)
        err = float(jnp.max(jnp.abs(out - ref)))
        assert err < 2e-3, err

    # Larger-channel config on the same code path with bf16 conv operands
    # (f32 accumulation / BN).  Loose tolerance: inputs quantized to bf16.
    CIN2, COUT2 = 8, 16
    x2 = jax.random.normal(ks[0], (N, CIN2, H, W), jnp.float32)
    w2 = 0.1 * jax.random.normal(ks[1], (COUT2, CIN2, KSIZE, KSIZE), jnp.float32)
    b2 = 0.1 * jax.random.normal(ks[2], (COUT2,), jnp.float32)
    g2 = 1.0 + 0.1 * jax.random.normal(ks[3], (COUT2,), jnp.float32)
    be2 = 0.1 * jax.random.normal(ks[4], (COUT2,), jnp.float32)
    out2 = conv_forward(x2, w2, b2, g2, be2, kernel_size=KSIZE, stride=1,
                        compute_dtype=jnp.bfloat16, tile_hw_cap=128)
    out2 = jax.block_until_ready(out2)
    ref2 = _ref_forward(x2, w2, b2, g2, be2, KSIZE, 1)
    err2 = float(jnp.max(jnp.abs(out2 - ref2)))
    assert err2 < 1e-1, err2

    print("KERNEL_OK")
</pallas_src>

<mosaic_0001>
module attributes {stable_mosaic.version = 11 : i64} {
  func.func @_conv_stats_kernel(%arg0: i32, %arg1: i32, %arg2: memref<4x36xf32, #tpu.memory_space<vmem>>, %arg3: memref<1x36x128xf32, #tpu.memory_space<vmem>>, %arg4: memref<1x4x128xf32, #tpu.memory_space<vmem>>, %arg5: memref<4x1xf32, #tpu.memory_space<vmem>>, %arg6: memref<4x1xf32, #tpu.memory_space<vmem>>) attributes {dimension_semantics = [#tpu.dimension_semantics<arbitrary>, #tpu.dimension_semantics<arbitrary>], iteration_bounds = array<i64: 2, 2>, scalar_prefetch = 0 : i64, scratch_operands = 0 : i64, tpu.core_type = #tpu.core_type<tc>, window_params = [{pipeline_mode = #tpu.pipeline_mode<synchronous>, transform_indices = @transform_0, window_bounds = array<i64: 4, 36>}, {transform_indices = @transform_1, window_bounds = array<i64: 1, 36, 128>}, {transform_indices = @transform_2, window_bounds = array<i64: 1, 4, 128>}, {pipeline_mode = #tpu.pipeline_mode<synchronous>, transform_indices = @transform_3, window_bounds = array<i64: 4, 1>}, {pipeline_mode = #tpu.pipeline_mode<synchronous>, transform_indices = @transform_4, window_bounds = array<i64: 4, 1>}]} {
    %c0_i32 = arith.constant 0 : i32
    %0 = arith.cmpi eq, %arg0, %c0_i32 : i32
    %c0_i32_0 = arith.constant 0 : i32
    %1 = arith.cmpi eq, %arg1, %c0_i32_0 : i32
    %2 = arith.andi %0, %1 : i1
    %3 = arith.extui %2 : i1 to i32
    %c0_i32_1 = arith.constant 0 : i32
    %4 = arith.cmpi ne, %3, %c0_i32_1 : i32
    scf.if %4 {
      %cst_19 = arith.constant 0.000000e+00 : f32
      %23 = vector.broadcast %cst_19 : f32 to vector<4x1xf32>
      %c0_20 = arith.constant 0 : index
      %c0_21 = arith.constant 0 : index
      %24 = vector.load %arg5[%c0_20, %c0_21] : memref<4x1xf32, #tpu.memory_space<vmem>>, vector<4x1xf32>
      tpu.vector_store %arg5[%c0_20, %c0_21], %23 {strides = array<i32>} : memref<4x1xf32, #tpu.memory_space<vmem>>, vector<4x1xf32>,
      %cst_22 = arith.constant 0.000000e+00 : f32
      %25 = vector.broadcast %cst_22 : f32 to vector<4x1xf32>
      %c0_23 = arith.constant 0 : index
      %c0_24 = arith.constant 0 : index
      %26 = vector.load %arg6[%c0_23, %c0_24] : memref<4x1xf32, #tpu.memory_space<vmem>>, vector<4x1xf32>
      tpu.vector_store %arg6[%c0_23, %c0_24], %25 {strides = array<i32>} : memref<4x1xf32, #tpu.memory_space<vmem>>, vector<4x1xf32>,
    } else {
    }
    %c0 = arith.constant 0 : index
    %c0_2 = arith.constant 0 : index
    %5 = vector.load %arg2[%c0, %c0_2] : memref<4x36xf32, #tpu.memory_space<vmem>>, vector<4x36xf32>
    %c0_3 = arith.constant 0 : index
    %c0_4 = arith.constant 0 : index
    %c0_5 = arith.constant 0 : index
    %6 = vector.load %arg3[%c0_3, %c0_4, %c0_5] : memref<1x36x128xf32, #tpu.memory_space<vmem>>, vector<1x36x128xf32>
    %7 = vector.shape_cast %6 : vector<1x36x128xf32> to vector<36x128xf32>
    %cst = arith.constant dense<0.000000e+00> : vector<4x128xf32>
    %8 = tpu.matmul %5, %7, %cst {dimension_numbers = #tpu.dot_dimension_numbers<[1], [0], [0], [1], [0, 0, 1, 1], [], []>} : vector<4x36xf32>, vector<36x128xf32>, vector<4x128xf32> -> vector<4x128xf32>
    %c0_6 = arith.constant 0 : index
    %c0_7 = arith.constant 0 : index
    %c0_8 = arith.constant 0 : index
    %9 = vector.load %arg4[%c0_6, %c0_7, %c0_8] : memref<1x4x128xf32, #tpu.memory_space<vmem>>, vector<1x4x128xf32>
    %10 = vector.shape_cast %9 : vector<1x4x128xf32> to vector<4x128xf32>
    %11 = vector.shape_cast %8 : vector<4x128xf32> to vector<1x4x128xf32>
    tpu.vector_store %arg4[%c0_6, %c0_7, %c0_8], %11 {strides = array<i32>} : memref<1x4x128xf32, #tpu.memory_space<vmem>>, vector<1x4x128xf32>,
    %c0_9 = arith.constant 0 : index
    %c0_10 = arith.constant 0 : index
    %12 = vector.load %arg5[%c0_9, %c0_10] : memref<4x1xf32, #tpu.memory_space<vmem>>, vector<4x1xf32>
    %cst_11 = arith.constant dense<0.000000e+00> : vector<4xf32>
    %13 = vector.multi_reduction <add>, %8, %cst_11 [1] : vector<4x128xf32> to vector<4xf32>
    %14 = vector.shape_cast %13 : vector<4xf32> to vector<4x1xf32>
    %15 = arith.addf %12, %14 : vector<4x1xf32>
    %c0_12 = arith.constant 0 : index
    %c0_13 = arith.constant 0 : index
    %16 = vector.load %arg5[%c0_12, %c0_13] : memref<4x1xf32, #tpu.memory_space<vmem>>, vector<4x1xf32>
    tpu.vector_store %arg5[%c0_12, %c0_13], %15 {strides = array<i32>} : memref<4x1xf32, #tpu.memory_space<vmem>>, vector<4x1xf32>,
    %c0_14 = arith.constant 0 : index
    %c0_15 = arith.constant 0 : index
    %17 = vector.load %arg6[%c0_14, %c0_15] : memref<4x1xf32, #tpu.memory_space<vmem>>, vector<4x1xf32>
    %18 = arith.mulf %8, %8 : vector<4x128xf32>
    %cst_16 = arith.constant dense<0.000000e+00> : vector<4xf32>
    %19 = vector.multi_reduction <add>, %18, %cst_16 [1] : vector<4x128xf32> to vector<4xf32>
    %20 = vector.shape_cast %19 : vector<4xf32> to vector<4x1xf32>
    %21 = arith.addf %17, %20 : vector<4x1xf32>
    %c0_17 = arith.constant 0 : index
    %c0_18 = arith.constant 0 : index
    %22 = vector.load %arg6[%c0_17, %c0_18] : memref<4x1xf32, #tpu.memory_space<vmem>>, vector<4x1xf32>
    tpu.vector_store %arg6[%c0_17, %c0_18], %21 {strides = array<i32>} : memref<4x1xf32, #tpu.memory_space<vmem>>, vector<4x1xf32>,
    return
  }
  func.func @transform_0(%arg0: i32, %arg1: i32) -> (i32, i32) {
    %c0_i32 = arith.constant 0 : i32
    %c0_i32_0 = arith.constant 0 : i32
    %c0_i32_1 = arith.constant 0 : i32
    return %c0_i32, %c0_i32_0 : i32, i32
  }
  func.func @transform_1(%arg0: i32, %arg1: i32) -> (i32, i32, i32) {
    %c0_i32 = arith.constant 0 : i32
    %c0_i32_0 = arith.constant 0 : i32
    return %arg0, %c0_i32, %arg1 : i32, i32, i32
  }
  func.func @transform_2(%arg0: i32, %arg1: i32) -> (i32, i32, i32) {
    %c0_i32 = arith.constant 0 : i32
    %c0_i32_0 = arith.constant 0 : i32
    return %arg0, %c0_i32, %arg1 : i32, i32, i32
  }
  func.func @transform_3(%arg0: i32, %arg1: i32) -> (i32, i32) {
    %c0_i32 = arith.constant 0 : i32
    %c0_i32_0 = arith.constant 0 : i32
    %c0_i32_1 = arith.constant 0 : i32
    return %c0_i32, %c0_i32_0 : i32, i32
  }
  func.func @transform_4(%arg0: i32, %arg1: i32) -> (i32, i32) {
    %c0_i32 = arith.constant 0 : i32
    %c0_i32_0 = arith.constant 0 : i32
    %c0_i32_1 = arith.constant 0 : i32
    return %c0_i32, %c0_i32_0 : i32, i32
  }
}

module attributes {stable_mosaic.version = 11 : i64} {
  func.func @_bn_elu_kernel(%arg0: i32, %arg1: i32, %arg2: memref<4x1xf32, #tpu.memory_space<vmem>>, %arg3: memref<4x1xf32, #tpu.memory_space<vmem>>, %arg4: memref<1x4x128xf32, #tpu.memory_space<vmem>>, %arg5: memref<1x4x128xf32, #tpu.memory_space<vmem>>) attributes {dimension_semantics = [#tpu.dimension_semantics<parallel>, #tpu.dimension_semantics<parallel>], iteration_bounds = array<i64: 2, 2>, scalar_prefetch = 0 : i64, scratch_operands = 0 : i64, tpu.core_type = #tpu.core_type<tc>, window_params = [{pipeline_mode = #tpu.pipeline_mode<synchronous>, transform_indices = @transform_0, window_bounds = array<i64: 4, 1>}, {pipeline_mode = #tpu.pipeline_mode<synchronous>, transform_indices = @transform_1, window_bounds = array<i64: 4, 1>}, {transform_indices = @transform_2, window_bounds = array<i64: 1, 4, 128>}, {transform_indices = @transform_3, window_bounds = array<i64: 1, 4, 128>}]} {
    %c0 = arith.constant 0 : index
    %c0_0 = arith.constant 0 : index
    %c0_1 = arith.constant 0 : index
    %0 = vector.load %arg4[%c0, %c0_0, %c0_1] : memref<1x4x128xf32, #tpu.memory_space<vmem>>, vector<1x4x128xf32>
    %1 = vector.shape_cast %0 : vector<1x4x128xf32> to vector<4x128xf32>
    %c0_2 = arith.constant 0 : index
    %c0_3 = arith.constant 0 : index
    %2 = vector.load %arg2[%c0_2, %c0_3] : memref<4x1xf32, #tpu.memory_space<vmem>>, vector<4x1xf32>
    %3 = vector.broadcast %2 : vector<4x1xf32> to vector<4x128xf32>
    %4 = arith.mulf %1, %3 : vector<4x128xf32>
    %c0_4 = arith.constant 0 : index
    %c0_5 = arith.constant 0 : index
    %5 = vector.load %arg3[%c0_4, %c0_5] : memref<4x1xf32, #tpu.memory_space<vmem>>, vector<4x1xf32>
    %6 = vector.broadcast %5 : vector<4x1xf32> to vector<4x128xf32>
    %7 = arith.addf %4, %6 : vector<4x128xf32>
    %cst = arith.constant 0.000000e+00 : f32
    %8 = vector.broadcast %cst : f32 to vector<4x128xf32>
    %9 = arith.minimumf %7, %8 : vector<4x128xf32>
    %10 = math.exp %9 : vector<4x128xf32>
    %cst_6 = arith.constant 1.000000e+00 : f32
    %11 = vector.broadcast %cst_6 : f32 to vector<4x128xf32>
    %12 = arith.subf %10, %11 : vector<4x128xf32>
    %cst_7 = arith.constant 0.000000e+00 : f32
    %13 = vector.broadcast %cst_7 : f32 to vector<4x128xf32>
    %14 = arith.cmpf ogt, %7, %13 : vector<4x128xf32>
    %15 = arith.select %14, %7, %12 : vector<4x128xi1>, vector<4x128xf32>
    %c0_8 = arith.constant 0 : index
    %c0_9 = arith.constant 0 : index
    %c0_10 = arith.constant 0 : index
    %16 = vector.load %arg5[%c0_8, %c0_9, %c0_10] : memref<1x4x128xf32, #tpu.memory_space<vmem>>, vector<1x4x128xf32>
    %17 = vector.shape_cast %16 : vector<1x4x128xf32> to vector<4x128xf32>
    %18 = vector.shape_cast %15 : vector<4x128xf32> to vector<1x4x128xf32>
    tpu.vector_store %arg5[%c0_8, %c0_9, %c0_10], %18 {strides = array<i32>} : memref<1x4x128xf32, #tpu.memory_space<vmem>>, vector<1x4x128xf32>,
    return
  }
  func.func @transform_0(%arg0: i32, %arg1: i32) -> (i32, i32) {
    %c0_i32 = arith.constant 0 : i32
    %c0_i32_0 = arith.constant 0 : i32
    %c0_i32_1 = arith.constant 0 : i32
    return %c0_i32, %c0_i32_0 : i32, i32
  }
  func.func @transform_1(%arg0: i32, %arg1: i32) -> (i32, i32) {
    %c0_i32 = arith.constant 0 : i32
    %c0_i32_0 = arith.constant 0 : i32
    %c0_i32_1 = arith.constant 0 : i32
    return %c0_i32, %c0_i32_0 : i32, i32
  }
  func.func @transform_2(%arg0: i32, %arg1: i32) -> (i32, i32, i32) {
    %c0_i32 = arith.constant 0 : i32
    %c0_i32_0 = arith.constant 0 : i32
    return %arg0, %c0_i32, %arg1 : i32, i32, i32
  }
  func.func @transform_3(%arg0: i32, %arg1: i32) -> (i32, i32, i32) {
    %c0_i32 = arith.constant 0 : i32
    %c0_i32_0 = arith.constant 0 : i32
    return %arg0, %c0_i32, %arg1 : i32, i32, i32
  }
}

</mosaic_0001>

<llo_original>
// kernel: conv_forward.3
$region0: #{conv_forward.3}
  #allocation0 [shape = 'u32[]', space=smem, size = 0x4, offset = 0x4, fixed_abs, tag = 'smem constant byte address 0x4 - core index']
  #allocation1 [shape = 'u32[144,128]{1,0:T(1,128)}', space=vmem, size = 0x12000, scoped, tag = 'internal scratch']
  %s0 = inlined_call_operand.vmem [shape: f32[4,1], index: 0, kind: input, shape index: {}]
  %s1 = inlined_call_operand.vmem [shape: f32[4,1], index: 1, kind: input, shape index: {}]
  %s2 = inlined_call_operand.vmem [shape: f32[2,4,256], index: 2, kind: input, shape index: {}, may-alias: {2,3}]
  %s3 = inlined_call_operand.vmem [shape: f32[2,4,256], index: 3, kind: output, shape index: {}, may-alias: {2,3}]
  %s4 = sld [smem:[#allocation0]]
  $region45: #{conv_forward.3} parent=0
    _
  %s6 = ssub.s32 1, %s4
  %s7 = scalar_select 0, %s6, %s4
  loop: start=0, step=1, limit=6
  $region2: #{conv_forward.3} parent=0 // loop_pre_header
    _
  $region3: #{conv_forward.3} parent=0 // loop_header
    %s9 = sphi 0, %s13
    %p10 = scmp.ge.s32.totalorder %s9, 6
    %s16 = sphi 0, %s28
    %s17 = sphi 0, %s24
    %s18 = sphi 0, %s16
    %s19 = sphi 0, %s17
    %s20 = sphi 0, %s18
    %s21 = sphi 0, %s19
    %s29 = sphi 0, %s29
    %s31 = sphi 0, %s29
    %s32 = sphi 0, %s31
    %s46 = sphi 0, %s32
    %s50 = sphi 0, %s50
    %s52 = sphi 0, %s50
    %s53 = sphi 0, %s52
    %s67 = sphi 0, %s53
    %s75 = sphi 0, %s77
    %s78 = sphi 0, %s75
    %s79 = sphi 0, %s78
    %s95 = sphi 0, %s79
    %s103 = sphi 0, %s105
    %s106 = sphi 0, %s103
    %s107 = sphi 0, %s106
    %s123 = sphi 0, %s107
  $region4: #{conv_forward.3} parent=0 // loop_header_branch
    %12 = sbr.rel (%p10) target = $region8
  $region5: #{conv_forward.3} parent=0 // loop_body
    %s14 = ssub.s32 %s9, 1
    %s15 = ssub.s32 %s9, 2
    %s22 = sadd.s32 1, %s17
    %p23 = scmp.ge.s32.totalorder %s22, 2
    %s24 = scalar_select %p23, 0, %s22
    %s25 = sadd.s32 1, %s16
    %s26 = scalar_select %p23, %s25, %s16
    %p27 = scmp.ge.s32.totalorder %s26, 2
    %s28 = scalar_select %p27, 0, %s26
    %s30 = sadd.s32 %s29, 1
    %p33 = scmp.eq.s32.totalorder %s9, 3
    %p34 = scmp.ne.s32.totalorder %s29, %s31
    %p35 = scmp.eq.s32.totalorder %s9, 0
    %p36 = por %p34, %p35
    %p37 = scmp.ne.s32.totalorder %s29, %s31
    %p38 = scmp.eq.s32.totalorder %s14, 3
    %p39 = por %p37, %p38
    %p40 = scmp.ne.s32.totalorder %s31, %s32
    %p41 = scmp.eq.s32.totalorder %s14, 0
    %p42 = por %p40, %p41
    %p43 = scmp.ne.s32.totalorder %s31, %s32
    %p44 = scmp.eq.s32.totalorder %s15, 3
    %p45 = por %p43, %p44
    %p47 = scmp.ne.s32.totalorder %s32, %s46
    %p48 = scmp.eq.s32.totalorder %s15, 0
    %p49 = por %p47, %p48
    %s51 = sadd.s32 %s50, 1
    %p54 = scmp.eq.s32.totalorder %s9, 3
    %p55 = scmp.ne.s32.totalorder %s50, %s52
    %p56 = scmp.eq.s32.totalorder %s9, 0
    %p57 = por %p55, %p56
    %p58 = scmp.ne.s32.totalorder %s50, %s52
    %p59 = scmp.eq.s32.totalorder %s14, 3
    %p60 = por %p58, %p59
    %p61 = scmp.ne.s32.totalorder %s52, %s53
    %p62 = scmp.eq.s32.totalorder %s14, 0
    %p63 = por %p61, %p62
    %p64 = scmp.ne.s32.totalorder %s52, %s53
    %p65 = scmp.eq.s32.totalorder %s15, 3
    %p66 = por %p64, %p65
    %p68 = scmp.ne.s32.totalorder %s53, %s67
    %p69 = scmp.eq.s32.totalorder %s15, 0
    %p70 = por %p68, %p69
    %s71 = ssub.s32 %s16, %s28
    %s72 = ssub.s32 %s17, %s24
    %s73 = sor.u32 %s71, %s72
    %p74 = scmp.eq.s32.totalorder %s73, 0
    %s76 = sadd.s32 %s75, 1
    %s77 = scalar_select %p74, %s75, %s76
    %p80 = pneg %p74
    %p81 = scmp.eq.s32.totalorder %s9, 3
    %p82 = por %p80, %p81
    %p83 = scmp.ne.s32.totalorder %s75, %s78
    %p84 = scmp.eq.s32.totalorder %s9, 0
    %p85 = por %p83, %p84
    %p86 = scmp.ne.s32.totalorder %s75, %s78
    %p87 = scmp.eq.s32.totalorder %s14, 3
    %p88 = por %p86, %p87
    %p89 = scmp.ne.s32.totalorder %s78, %s79
    %p90 = scmp.eq.s32.totalorder %s14, 0
    %p91 = por %p89, %p90
    %p92 = scmp.ne.s32.totalorder %s78, %s79
    %p93 = scmp.eq.s32.totalorder %s15, 3
    %p94 = por %p92, %p93
    %p96 = scmp.ne.s32.totalorder %s79, %s95
    %p97 = scmp.eq.s32.totalorder %s15, 0
    %p98 = por %p96, %p97
    %s99 = ssub.s32 %s16, %s28
    %s100 = ssub.s32 %s17, %s24
    %s101 = sor.u32 %s99, %s100
    %p102 = scmp.eq.s32.totalorder %s101, 0
    %s104 = sadd.s32 %s103, 1
    %s105 = scalar_select %p102, %s103, %s104
    %p108 = pneg %p102
    %p109 = scmp.eq.s32.totalorder %s9, 3
    %p110 = por %p108, %p109
    %p111 = scmp.ne.s32.totalorder %s103, %s106
    %p112 = scmp.eq.s32.totalorder %s9, 0
    %p113 = por %p111, %p112
    %p114 = scmp.ne.s32.totalorder %s103, %s106
    %p115 = scmp.eq.s32.totalorder %s14, 3
    %p116 = por %p114, %p115
    %p117 = scmp.ne.s32.totalorder %s106, %s107
    %p118 = scmp.eq.s32.totalorder %s14, 0
    %p119 = por %p117, %p118
    %p120 = scmp.ne.s32.totalorder %s106, %s107
    %p121 = scmp.eq.s32.totalorder %s15, 3
    %p122 = por %p120, %p121
    %p124 = scmp.ne.s32.totalorder %s107, %s123
    %p125 = scmp.eq.s32.totalorder %s15, 0
    %p126 = por %p124, %p125
    %p127 = scmp.le.s32.totalorder 1, %s9
    %p128 = scmp.lt.s32.totalorder %s9, 5
    %p129 = pnand %p127, %p128
    %p130 = pneg %p129
    // Predicated region
    $region9: #{conv_forward.3} parent=5 // pred_check
      _
    $region10: #{conv_forward.3} parent=5 // pred_check_branch
      %132 = sbr.rel (%p129) target = $region12
    $region11: #{conv_forward.3} parent=5 // pred_region
      %s133 = ssub.s32 %s9, 1
      // Predicated region
      $region13: #{conv_forward.3} parent=11 // pred_check
        %p134 = pneg %p42
      $region14: #{conv_forward.3} parent=11 // pred_check_branch
        %136 = sbr.rel (%p134) target = $region16
      $region15: #{conv_forward.3} parent=11 // pred_region
        _
      $region16: #{conv_forward.3} parent=11 // pred_fallthru
        _
      // Predicated region
      $region17: #{conv_forward.3} parent=11 // pred_check
        %p137 = pneg %p63
      $region18: #{conv_forward.3} parent=11 // pred_check_branch
        %139 = sbr.rel (%p137) target = $region20
      $region19: #{conv_forward.3} parent=11 // pred_region
        _
      $region20: #{conv_forward.3} parent=11 // pred_fallthru
        _
    $region12: #{conv_forward.3} parent=5 // pred_fallthru
      _
    %p140 = scmp.lt.s32.totalorder %s9, 4
    // Predicated region
    $region21: #{conv_forward.3} parent=5 // pred_check
      %p141 = pneg %p140
    $region22: #{conv_forward.3} parent=5 // pred_check_branch
      %143 = sbr.rel (%p141) target = $region24
    $region23: #{conv_forward.3} parent=5 // pred_region
      // Predicated region
      $region25: #{conv_forward.3} parent=23 // pred_check
        %p144 = pneg %p85
      $region26: #{conv_forward.3} parent=23 // pred_check_branch
        %146 = sbr.rel (%p144) target = $region28
      $region27: #{conv_forward.3} parent=23 // pred_region
        %p147 = scmp.lt.s32.totalorder %s16, 1
        %s148 = scalar_select %p147, %s16, 1
        %p149 = scmp.lt.s32.totalorder %s17, 1
        %s150 = scalar_select %p149, %s17, 1
        %s151 = smul.addr %s148, 2
        %s152 = sadd.s32 %s150, %s151
        %s153 = smul.addr %s152, 4
        %s154 = scalar_lea.vmem %s2, %s153
      $region28: #{conv_forward.3} parent=23 // pred_fallthru
        _
    $region24: #{conv_forward.3} parent=5 // pred_fallthru
      _
    %p155 = scmp.le.s32.totalorder 1, %s9
    %p156 = scmp.lt.s32.totalorder %s9, 5
    %p157 = pnand %p155, %p156
    %p158 = pneg %p157
    // Predicated region
    $region29: #{conv_forward.3} parent=5 // pred_check
      _
    $region30: #{conv_forward.3} parent=5 // pred_check_branch
      %160 = sbr.rel (%p157) target = $region32
    $region31: #{conv_forward.3} parent=5 // pred_region
      %s161 = ssub.s32 %s9, 1
      %p162 = pneg %p42
      %p163 = pneg %p39
      %p164 = pneg %p63
      %p165 = pneg %p60
      %p166 = scmp.lt.s32.totalorder %s18, 1
      %s167 = scalar_select %p166, %s18, 1
      %p168 = scmp.lt.s32.totalorder %s19, 1
      %s169 = scalar_select %p168, %s19, 1
      %s170 = smul.addr %s167, 2
      %s171 = sadd.s32 %s169, %s170
      %s172 = smul.addr %s171, 4
      %s173 = scalar_lea.vmem %s2, %s172
      %p174 = pneg %p91
      %p175 = pneg %p88
      %p176 = pneg %p119
      %p177 = pneg %p116
      %p178 = scmp.lt.s32.totalorder %s18, 1
      %s179 = scalar_select %p178, %s18, 1
      %p180 = scmp.lt.s32.totalorder %s19, 1
      %s181 = scalar_select %p180, %s19, 1
      %s182 = smul.addr %s179, 2
      %s183 = sadd.s32 %s181, %s182
      %s184 = smul.addr %s183, 4
      %s185 = scalar_lea.vmem %s3, %s184
      %p186 = scmp.lt.s32.totalorder %s18, 1
      %s187 = scalar_select %p186, %s18, 1
      %p188 = scmp.lt.s32.totalorder %s19, 1
      %s189 = scalar_select %p188, %s19, 1
      %s190 = smul.addr %s187, 2
      %s191 = sadd.s32 %s189, %s190
      %s192 = smul.addr %s191, 4
      %s193 = scalar_lea.vmem %s2, %s192
      %p194 = scmp.lt.s32.totalorder %s18, 1
      %s195 = scalar_select %p194, %s18, 1
      %p196 = scmp.lt.s32.totalorder %s19, 1
      %s197 = scalar_select %p196, %s19, 1
      %s198 = smul.addr %s195, 2
      %s199 = sadd.s32 %s197, %s198
      %s200 = smul.addr %s199, 4
      %s201 = scalar_lea.vmem %s3, %s200
      %v202 = vld [vmem:[%s193] sm:$0xf]
      %v203 = vld [vmem:[%s0] sm:$0xf]
      %205 = vset.pattern.permute.xlu0 0
      %206 = vperm.xlu0 %205, %v203
      %v207 = vpop.permute.xlu0 %206
      %v209 = vmul.f32 %v202, %v207
      %v210 = vld [vmem:[%s1] sm:$0xf]
      %212 = vset.pattern.permute.xlu0 0
      %213 = vperm.xlu0 %212, %v210
      %v214 = vpop.permute.xlu0 %213
      %v216 = vadd.f32 %v209, %v214
      %v217 = vmin.f32 %v216, 0.0
      %v218 = vmul.f32 %v217, 1.442695
      %v219 = vpow.pop %v218
      %v220 = vsub.f32 %v219, 1.0
      %vm221 = vcmp.gt.f32.partialorder %v216, 0.0
      %v222 = vsel %vm221, %v216, %v220
      %223 = vst [vmem:[%s201] sm:$0xf] %v222
      %p224 = scmp.lt.s32.totalorder %s18, 1
      %s225 = scalar_select %p224, %s18, 1
      %p226 = scmp.lt.s32.totalorder %s19, 1
      %s227 = scalar_select %p226, %s19, 1
      %s228 = smul.addr %s225, 2
      %s229 = sadd.s32 %s227, %s228
      %s230 = smul.addr %s229, 4
      %s231 = scalar_lea.vmem %s3, %s230
      // Predicated region
      $region33: #{conv_forward.3} parent=31 // pred_check
        %p232 = pneg %p116
      $region34: #{conv_forward.3} parent=31 // pred_check_branch
        %234 = sbr.rel (%p232) target = $region36
      $region35: #{conv_forward.3} parent=31 // pred_region
        _
      $region36: #{conv_forward.3} parent=31 // pred_fallthru
        _
    $region32: #{conv_forward.3} parent=5 // pred_fallthru
      _
    %p235 = scmp.le.s32.totalorder 2, %s9
    // Predicated region
    $region37: #{conv_forward.3} parent=5 // pred_check
      %p236 = pneg %p235
    $region38: #{conv_forward.3} parent=5 // pred_check_branch
      %238 = sbr.rel (%p236) target = $region40
    $region39: #{conv_forward.3} parent=5 // pred_region
      %s239 = ssub.s32 %s9, 2
      // Predicated region
      $region41: #{conv_forward.3} parent=39 // pred_check
        %p240 = pneg %p122
      $region42: #{conv_forward.3} parent=39 // pred_check_branch
        %242 = sbr.rel (%p240) target = $region44
      $region43: #{conv_forward.3} parent=39 // pred_region
        %p243 = scmp.lt.s32.totalorder %s20, 1
        %s244 = scalar_select %p243, %s20, 1
        %p245 = scmp.lt.s32.totalorder %s21, 1
        %s246 = scalar_select %p245, %s21, 1
        %s247 = smul.addr %s244, 2
        %s248 = sadd.s32 %s246, %s247
        %s249 = smul.addr %s248, 4
        %s250 = scalar_lea.vmem %s3, %s249
      $region44: #{conv_forward.3} parent=39 // pred_fallthru
        _
    $region40: #{conv_forward.3} parent=5 // pred_fallthru
      _
  $region6: #{conv_forward.3} parent=0 // loop_footer
    %s13 = sadd.s32 1, %s9
  $region7: #{conv_forward.3} parent=0 // loop_footer_branch
    %8 = sbr.rel target = $region3
  $region8: #{conv_forward.3} parent=0 // loop_exit
    _

// kernel: conv_forward.2
$region0: #{conv_forward.2}
  #allocation0 [shape = 'u32[]', space=smem, size = 0x4, offset = 0x4, fixed_abs, tag = 'smem constant byte address 0x4 - core index']
  #allocation1 [shape = 'u32[144,128]{1,0:T(1,128)}', space=vmem, size = 0x12000, scoped, tag = 'internal scratch']
  %s0 = inlined_call_operand.vmem [shape: f32[4,36], index: 0, kind: input, shape index: {}]
  %s1 = inlined_call_operand.vmem [shape: f32[2,36,256], index: 1, kind: input, shape index: {}]
  %s2 = inlined_call_operand.vmem [shape: f32[2,4,256], index: 2, kind: output, shape index: {0}]
  %s3 = inlined_call_operand.vmem [shape: f32[4,1], index: 3, kind: output, shape index: {1}]
  %s4 = inlined_call_operand.vmem [shape: f32[4,1], index: 4, kind: output, shape index: {2}]
  %5 = xla_tuple %s2, %s3, %s4
  %s6 = sld [smem:[#allocation0]]
  $region99: #{conv_forward.2} parent=0
    _
  %s8 = ssub.s32 1, %s6
  %s9 = scalar_select 0, %s8, %s6
  $region1: #{conv_forward.2} parent=0
    #allocation2 [shape = 'u8[40960]{0}', space=vmem, size = 0xa000, scoped, tag = 'input window, operand 1']
    loop: start=0, step=1, limit=6
    $region2: #{conv_forward.2} parent=1 // loop_pre_header
      _
    $region3: #{conv_forward.2} parent=1 // loop_header
      %s11 = sphi 0, %s15
      %p12 = scmp.ge.s32.totalorder %s11, 6
      %s18 = sphi 0, %s30
      %s19 = sphi 0, %s26
      %s20 = sphi 0, %s18
      %s21 = sphi 0, %s19
      %s22 = sphi 0, %s20
      %s23 = sphi 0, %s21
      %s31 = sphi 0, %s31
      %s33 = sphi 0, %s31
      %s34 = sphi 0, %s33
      %s48 = sphi 0, %s34
      %s56 = sphi 0, %s58
      %s59 = sphi 0, %s56
      %s60 = sphi 0, %s59
      %s76 = sphi 0, %s60
      %s84 = sphi 0, %s86
      %s87 = sphi 0, %s84
      %s88 = sphi 0, %s87
      %s104 = sphi 0, %s88
      %s108 = sphi 0, %s108
      %s110 = sphi 0, %s108
      %s111 = sphi 0, %s110
      %s125 = sphi 0, %s111
      %s129 = sphi 0, %s129
      %s131 = sphi 0, %s129
      %s132 = sphi 0, %s131
      %s146 = sphi 0, %s132
    $region4: #{conv_forward.2} parent=1 // loop_header_branch
      %14 = sbr.rel (%p12) target = $region8
    $region5: #{conv_forward.2} parent=1 // loop_body
      %s16 = ssub.s32 %s11, 1
      %s17 = ssub.s32 %s11, 2
      %s24 = sadd.s32 1, %s19
      %p25 = scmp.ge.s32.totalorder %s24, 2
      %s26 = scalar_select %p25, 0, %s24
      %s27 = sadd.s32 1, %s18
      %s28 = scalar_select %p25, %s27, %s18
      %p29 = scmp.ge.s32.totalorder %s28, 2
      %s30 = scalar_select %p29, 0, %s28
      %s32 = sadd.s32 %s31, 1
      %p35 = scmp.eq.s32.totalorder %s11, 3
      %p36 = scmp.ne.s32.totalorder %s31, %s33
      %p37 = scmp.eq.s32.totalorder %s11, 0
      %p38 = por %p36, %p37
      %p39 = scmp.ne.s32.totalorder %s31, %s33
      %p40 = scmp.eq.s32.totalorder %s16, 3
      %p41 = por %p39, %p40
      %p42 = scmp.ne.s32.totalorder %s33, %s34
      %p43 = scmp.eq.s32.totalorder %s16, 0
      %p44 = por %p42, %p43
      %p45 = scmp.ne.s32.totalorder %s33, %s34
      %p46 = scmp.eq.s32.totalorder %s17, 3
      %p47 = por %p45, %p46
      %p49 = scmp.ne.s32.totalorder %s34, %s48
      %p50 = scmp.eq.s32.totalorder %s17, 0
      %p51 = por %p49, %p50
      %s52 = ssub.s32 %s18, %s30
      %s53 = ssub.s32 %s19, %s26
      %s54 = sor.u32 %s52, %s53
      %p55 = scmp.eq.s32.totalorder %s54, 0
      %s57 = sadd.s32 %s56, 1
      %s58 = scalar_select %p55, %s56, %s57
      %p61 = pneg %p55
      %p62 = scmp.eq.s32.totalorder %s11, 3
      %p63 = por %p61, %p62
      %p64 = scmp.ne.s32.totalorder %s56, %s59
      %p65 = scmp.eq.s32.totalorder %s11, 0
      %p66 = por %p64, %p65
      %p67 = scmp.ne.s32.totalorder %s56, %s59
      %p68 = scmp.eq.s32.totalorder %s16, 3
      %p69 = por %p67, %p68
      %p70 = scmp.ne.s32.totalorder %s59, %s60
      %p71 = scmp.eq.s32.totalorder %s16, 0
      %p72 = por %p70, %p71
      %p73 = scmp.ne.s32.totalorder %s59, %s60
      %p74 = scmp.eq.s32.totalorder %s17, 3
      %p75 = por %p73, %p74
      %p77 = scmp.ne.s32.totalorder %s60, %s76
      %p78 = scmp.eq.s32.totalorder %s17, 0
      %p79 = por %p77, %p78
      %s80 = ssub.s32 %s18, %s30
      %s81 = ssub.s32 %s19, %s26
      %s82 = sor.u32 %s80, %s81
      %p83 = scmp.eq.s32.totalorder %s82, 0
      %s85 = sadd.s32 %s84, 1
      %s86 = scalar_select %p83, %s84, %s85
      %p89 = pneg %p83
      %p90 = scmp.eq.s32.totalorder %s11, 3
      %p91 = por %p89, %p90
      %p92 = scmp.ne.s32.totalorder %s84, %s87
      %p93 = scmp.eq.s32.totalorder %s11, 0
      %p94 = por %p92, %p93
      %p95 = scmp.ne.s32.totalorder %s84, %s87
      %p96 = scmp.eq.s32.totalorder %s16, 3
      %p97 = por %p95, %p96
      %p98 = scmp.ne.s32.totalorder %s87, %s88
      %p99 = scmp.eq.s32.totalorder %s16, 0
      %p100 = por %p98, %p99
      %p101 = scmp.ne.s32.totalorder %s87, %s88
      %p102 = scmp.eq.s32.totalorder %s17, 3
      %p103 = por %p101, %p102
      %p105 = scmp.ne.s32.totalorder %s88, %s104
      %p106 = scmp.eq.s32.totalorder %s17, 0
      %p107 = por %p105, %p106
      %s109 = sadd.s32 %s108, 1
      %p112 = scmp.eq.s32.totalorder %s11, 3
      %p113 = scmp.ne.s32.totalorder %s108, %s110
      %p114 = scmp.eq.s32.totalorder %s11, 0
      %p115 = por %p113, %p114
      %p116 = scmp.ne.s32.totalorder %s108, %s110
      %p117 = scmp.eq.s32.totalorder %s16, 3
      %p118 = por %p116, %p117
      %p119 = scmp.ne.s32.totalorder %s110, %s111
      %p120 = scmp.eq.s32.totalorder %s16, 0
      %p121 = por %p119, %p120
      %p122 = scmp.ne.s32.totalorder %s110, %s111
      %p123 = scmp.eq.s32.totalorder %s17, 3
      %p124 = por %p122, %p123
      %p126 = scmp.ne.s32.totalorder %s111, %s125
      %p127 = scmp.eq.s32.totalorder %s17, 0
      %p128 = por %p126, %p127
      %s130 = sadd.s32 %s129, 1
      %p133 = scmp.eq.s32.totalorder %s11, 3
      %p134 = scmp.ne.s32.totalorder %s129, %s131
      %p135 = scmp.eq.s32.totalorder %s11, 0
      %p136 = por %p134, %p135
      %p137 = scmp.ne.s32.totalorder %s129, %s131
      %p138 = scmp.eq.s32.totalorder %s16, 3
      %p139 = por %p137, %p138
      %p140 = scmp.ne.s32.totalorder %s131, %s132
      %p141 = scmp.eq.s32.totalorder %s16, 0
      %p142 = por %p140, %p141
      %p143 = scmp.ne.s32.totalorder %s131, %s132
      %p144 = scmp.eq.s32.totalorder %s17, 3
      %p145 = por %p143, %p144
      %p147 = scmp.ne.s32.totalorder %s132, %s146
      %p148 = scmp.eq.s32.totalorder %s17, 0
      %p149 = por %p147, %p148
      %p150 = scmp.le.s32.totalorder 1, %s11
      %p151 = scmp.lt.s32.totalorder %s11, 5
      %p152 = pnand %p150, %p151
      %p153 = pneg %p152
      // Predicated region
      $region9: #{conv_forward.2} parent=5 // pred_check
        _
      $region10: #{conv_forward.2} parent=5 // pred_check_branch
        %155 = sbr.rel (%p152) target = $region12
      $region11: #{conv_forward.2} parent=5 // pred_region
        %s156 = ssub.s32 %s11, 1
        // Predicated region
        $region13: #{conv_forward.2} parent=11 // pred_check
          %p157 = pneg %p44
        $region14: #{conv_forward.2} parent=11 // pred_check_branch
          %159 = sbr.rel (%p157) target = $region16
        $region15: #{conv_forward.2} parent=11 // pred_region
          _
        $region16: #{conv_forward.2} parent=11 // pred_fallthru
          _
      $region12: #{conv_forward.2} parent=5 // pred_fallthru
        _
      %p160 = scmp.lt.s32.totalorder %s11, 4
      // Predicated region
      $region17: #{conv_forward.2} parent=5 // pred_check
        %p161 = pneg %p160
      $region18: #{conv_forward.2} parent=5 // pred_check_branch
        %163 = sbr.rel (%p161) target = $region20
      $region19: #{conv_forward.2} parent=5 // pred_region
        // Predicated region
        $region21: #{conv_forward.2} parent=19 // pred_check
          %p164 = pneg %p66
        $region22: #{conv_forward.2} parent=19 // pred_check_branch
          %166 = sbr.rel (%p164) target = $region24
        $region23: #{conv_forward.2} parent=19 // pred_region
          %s167 = sand.u32 %s56, 1
          %s168 = sand.u32 %s56, 1
          %s169 = smul.addr %s168, 40
          %s170 = scalar_lea.vmem [#allocation2], %s169
          %s171 = smul.addr %s18, 10
          %s172 = sadd.s32 %s19, %s171
          %s173 = smul.addr %s172, 8
          %s174 = scalar_lea.vmem %s1, %s173
          // Predicated region
          $region25: #{conv_forward.2} parent=23 // pred_check
            _
          $region26: #{conv_forward.2} parent=23 // pred_check_branch
            %176 = sbr.rel (0) target = $region28
          $region27: #{conv_forward.2} parent=23 // pred_region
            // Predicated region
            $region29: #{conv_forward.2} parent=27 // pred_check
              _
            $region30: #{conv_forward.2} parent=27 // pred_check_branch
              %178 = sbr.rel (0) target = $region32
            $region31: #{conv_forward.2} parent=27 // pred_region
              // Predicated region
              $region44: #{conv_forward.2} parent=31 // pred_check
                _
              $region45: #{conv_forward.2} parent=31 // pred_check_branch
                %201 = sbr.rel (0) target = $region47
              $region46: #{conv_forward.2} parent=31 // pred_region
                loop: start=0, step=1, limit=1
                $region48: #{conv_forward.2} parent=46 // loop_pre_header
                  _
                $region49: #{conv_forward.2} parent=46 // loop_header
                  %s203 = sphi 0, %s207
                  %p204 = scmp.ge.s32.totalorder %s203, 1
                  %s208 = sphi %s174, %s174
                  %s209 = sphi %s170, %s170
                $region50: #{conv_forward.2} parent=46 // loop_header_branch
                  %206 = sbr.rel (%p204) target = $region54
                $region51: #{conv_forward.2} parent=46 // loop_body
                  %v210 = vld [vmem:[%s208] sm:$0xff]
                  %211 = vst [vmem:[%s209] sm:$0xff] %v210
                  %v212 = vld [vmem:[%s208 + $0x10] sm:$0xff]
                  %213 = vst [vmem:[%s209 + $0x8] sm:$0xff] %v212
                  %v214 = vld [vmem:[%s208 + $0x20] sm:$0xff]
                  %215 = vst [vmem:[%s209 + $0x10] sm:$0xff] %v214
                  %v216 = vld [vmem:[%s208 + $0x30] sm:$0xff]
                  %217 = vst [vmem:[%s209 + $0x18] sm:$0xff] %v216
                  %v218 = vld [vmem:[%s208 + $0x40] sm:$0xff]
                  %219 = vst [vmem:[%s209 + $0x20] sm:$0xff] %v218
                $region52: #{conv_forward.2} parent=46 // loop_footer
                  %s207 = sadd.s32 1, %s203
                $region53: #{conv_forward.2} parent=46 // loop_footer_branch
                  %202 = sbr.rel target = $region49
                $region54: #{conv_forward.2} parent=46 // loop_exit
                  _
              $region47: #{conv_forward.2} parent=31 // pred_fallthru
                _
              // Predicated region
              $region55: #{conv_forward.2} parent=31 // pred_check
                _
              $region56: #{conv_forward.2} parent=31 // pred_check_branch
                %221 = sbr.rel target = $region58
              $region57: #{conv_forward.2} parent=31 // pred_region
                _
              $region58: #{conv_forward.2} parent=31 // pred_fallthru
                _
            $region32: #{conv_forward.2} parent=27 // pred_fallthru
              _
            // Predicated region
            $region33: #{conv_forward.2} parent=27 // pred_check
              _
            $region34: #{conv_forward.2} parent=27 // pred_check_branch
              %180 = sbr.rel target = $region36
            $region35: #{conv_forward.2} parent=27 // pred_region
              loop: start=0, step=1, limit=1
              $region37: #{conv_forward.2} parent=35 // loop_pre_header
                _
              $region38: #{conv_forward.2} parent=35 // loop_header
                %s183 = sphi 0, %s187
                %p184 = scmp.ge.s32.totalorder %s183, 1
                %s188 = sphi %s174, %s174
                %s189 = sphi %s170, %s170
              $region39: #{conv_forward.2} parent=35 // loop_header_branch
                %186 = sbr.rel (%p184) target = $region43
              $region40: #{conv_forward.2} parent=35 // loop_body
                %v190 = vld [vmem:[%s188] sm:$0xff]
                %191 = vst [vmem:[%s189] sm:$0xff] %v190
                %v192 = vld [vmem:[%s188 + $0x10] sm:$0xff]
                %193 = vst [vmem:[%s189 + $0x8] sm:$0xff] %v192
                %v194 = vld [vmem:[%s188 + $0x20] sm:$0xff]
                %195 = vst [vmem:[%s189 + $0x10] sm:$0xff] %v194
                %v196 = vld [vmem:[%s188 + $0x30] sm:$0xff]
                %197 = vst [vmem:[%s189 + $0x18] sm:$0xff] %v196
                %v198 = vld [vmem:[%s188 + $0x40] sm:$0xff]
                %199 = vst [vmem:[%s189 + $0x20] sm:$0xff] %v198
              $region41: #{conv_forward.2} parent=35 // loop_footer
                %s187 = sadd.s32 1, %s183
              $region42: #{conv_forward.2} parent=35 // loop_footer_branch
                %182 = sbr.rel target = $region38
              $region43: #{conv_forward.2} parent=35 // loop_exit
                _
            $region36: #{conv_forward.2} parent=27 // pred_fallthru
              _
          $region28: #{conv_forward.2} parent=23 // pred_fallthru
            _
          %222 = vnop
        $region24: #{conv_forward.2} parent=19 // pred_fallthru
          _
      $region20: #{conv_forward.2} parent=5 // pred_fallthru
        _
      %p223 = scmp.le.s32.totalorder 1, %s11
      %p224 = scmp.lt.s32.totalorder %s11, 5
      %p225 = pnand %p223, %p224
      %p226 = pneg %p225
      // Predicated region
      $region59: #{conv_forward.2} parent=5 // pred_check
        _
      $region60: #{conv_forward.2} parent=5 // pred_check_branch
        %228 = sbr.rel (%p225) target = $region62
      $region61: #{conv_forward.2} parent=5 // pred_region
        %s229 = ssub.s32 %s11, 1
        %s230 = sand.u32 %s59, 1
        %s231 = sand.u32 %s59, 1
        %s232 = smul.addr %s231, 40
        %s233 = scalar_lea.vmem [#allocation2], %s232
        // Predicated region
        $region63: #{conv_forward.2} parent=61 // pred_check
          %p234 = pneg %p72
        $region64: #{conv_forward.2} parent=61 // pred_check_branch
          %236 = sbr.rel (%p234) target = $region66
        $region65: #{conv_forward.2} parent=61 // pred_region
          _
        $region66: #{conv_forward.2} parent=61 // pred_fallthru
          _
        %p237 = pneg %p44
        %p238 = pneg %p41
        %s239 = sand.u32 %s59, 1
        %s240 = sand.u32 %s59, 1
        %s241 = smul.addr %s240, 40
        %s242 = scalar_lea.vmem [#allocation2], %s241
        %p243 = pneg %p72
        %p244 = pneg %p69
        %p245 = pneg %p100
        %p246 = pneg %p97
        %p247 = scmp.lt.s32.totalorder %s20, 1
        %s248 = scalar_select %p247, %s20, 1
        %p249 = scmp.lt.s32.totalorder %s21, 1
        %s250 = scalar_select %p249, %s21, 1
        %s251 = smul.addr %s248, 2
        %s252 = sadd.s32 %s250, %s251
        %s253 = smul.addr %s252, 4
        %s254 = scalar_lea.vmem %s2, %s253
        %p255 = pneg %p121
        %p256 = pneg %p118
        %p257 = pneg %p142
        %p258 = pneg %p139
        %p259 = scmp.lt.s32.totalorder %s20, 1
        %s260 = scalar_select %p259, %s20, 1
        %p261 = scmp.lt.s32.totalorder %s21, 1
        %s262 = scalar_select %p261, %s21, 1
        %s263 = smul.addr %s260, 2
        %s264 = sadd.s32 %s262, %s263
        %s265 = smul.addr %s264, 4
        %s266 = scalar_lea.vmem %s2, %s265
        %p267 = scmp.eq.s32.totalorder %s20, 0
        %p268 = scmp.eq.s32.totalorder %s21, 0
        %p269 = pnand %p267, %p268
        %p270 = pneg %p269
        // Predicated region
        $region67: #{conv_forward.2} parent=61 // pred_check
          _
        $region68: #{conv_forward.2} parent=61 // pred_check_branch
          %272 = sbr.rel (%p269) target = $region70
        $region69: #{conv_forward.2} parent=61 // pred_region
          %vm273 = vcmask 3072
          %274 = vst.msk [vmem:[%s3] sm:$0xf] %vm273, 0.0
          %275 = vst.msk [vmem:[%s4] sm:$0xf] %vm273, 0.0
        $region70: #{conv_forward.2} parent=61 // pred_fallthru
          _
        %v276 = vld [vmem:[%s0] sm:$0xf]
        %v277 = vld [vmem:[%s233] sm:$0xff]
        %v278 = vld [vmem:[%s233 + $0x8] sm:$0xff]
        %v279 = vld [vmem:[%s233 + $0x10] sm:$0xff]
        %v280 = vld [vmem:[%s233 + $0x18] sm:$0xff]
        %v281 = vld [vmem:[%s233 + $0x20] sm:$0xf]
        %vm282 = vcmask 293888
        %v284 = vsel %vm282, %v276, 0
        %vm286 = vcmask 1043456
        %v288 = vsel %vm286, %v281, 0
        %290 = vmatprep.subr.mxu0 0.0
        %291 = vmatpush1.msra.mxu0 %v277
        %292 = vmatprep.subr.mxu0 0.0
        %293 = vmatpush1.msra.mxu0 %v278
        %294 = vmatprep.subr.mxu0 0.0
        %295 = vmatpush1.msra.mxu0 %v279
        %296 = vmatprep.subr.mxu0 0.0
        %297 = vmatpush1.msra.mxu0 %v280
        %298 = vmatprep.subr.mxu0 0.0
        %299 = vmatpush1.msra.mxu0 %v288
        %300 = vmatprep.subr.mxu0 0.0
        %301 = vmatpush1.msra.mxu0 0.0
        %302 = vmatprep.subr.mxu0 0.0
        %303 = vmatpush1.msra.mxu0 0.0
        %304 = vmatprep.subr.mxu0 0.0
        %305 = vmatpush1.msra.mxu0 0.0
        %306 = vmatprep.subr.mxu0 0.0
        %307 = vmatpush1.msra.mxu0 0.0
        %308 = vmatprep.subr.mxu0 0.0
        %309 = vmatpush1.msra.mxu0 0.0
        %310 = vmatprep.subr.mxu0 0.0
        %311 = vmatpush1.msra.mxu0 0.0
        %312 = vmatprep.subr.mxu0 0.0
        %313 = vmatpush1.msra.mxu0 0.0
        %314 = vmatprep.subr.mxu0 0.0
        %315 = vmatpush1.msra.mxu0 0.0
        %316 = vmatprep.subr.mxu0 0.0
        %317 = vmatpush1.msra.mxu0 0.0
        %318 = vmatprep.subr.mxu0 0.0
        %319 = vmatpush1.msra.mxu0 0.0
        %320 = vmatprep.subr.mxu0 0.0
        %321 = vmatpush1.msra.mxu0 0.0
        %322 = vmatprep.subr.mxu0 0.0
        %323 = vmatpush1.msra.mxu0 0.0
        %324 = vmatprep.subr.mxu0 0.0
        %325 = vmatpush1.msra.mxu0 0.0
        %326 = vmatprep.subr.mxu0 0.0
        %327 = vmatpush1.msra.mxu0 0.0
        %328 = vmatprep.subr.mxu0 0.0
        %329 = vmatpush1.msra.mxu0 0.0
        %330 = vmatprep.subr.mxu0 0.0
        %331 = vmatpush1.msra.mxu0 0.0
        %332 = vmatprep.subr.mxu0 0.0
        %333 = vmatpush1.msra.mxu0 0.0
        %334 = vmatprep.subr.mxu0 0.0
        %335 = vmatpush1.msra.mxu0 0.0
        %336 = vmatprep.subr.mxu0 0.0
        %337 = vmatpush1.msra.mxu0 0.0
        %338 = vmatprep.subr.mxu0 0.0
        %339 = vmatpush1.msra.mxu0 0.0
        %340 = vmatprep.subr.mxu0 0.0
        %341 = vmatpush1.msra.mxu0 0.0
        %342 = vmatprep.subr.mxu0 0.0
        %343 = vmatpush1.msra.mxu0 0.0
        %344 = vmatprep.subr.mxu0 0.0
        %345 = vmatpush1.msra.mxu0 0.0
        %346 = vmatprep.subr.mxu0 0.0
        %347 = vmatpush1.msra.mxu0 0.0
        %348 = vmatprep.subr.mxu0 0.0
        %349 = vmatpush1.msra.mxu0 0.0
        %350 = vmatprep.subr.mxu0 0.0
        %351 = vmatpush1.msra.mxu0 0.0
        %352 = vmatprep.subr.mxu0 0.0
        %353 = vmatpush1.msra.mxu0 0.0
        %354 = vmatprep.mubr.f32.mxu0 0.0
        %355 = vmatmul.mubr.f32.gmra.mrb[0].mxu0 %v284
        %v356 = vpop.f32.mrb[0].mxu0
        %v357 = vadd.f32 0.0, %v356
        %v358 = vpop.f32.mrb[0].mxu0
        %359 = vdwg.mxu0
        %360 = vst [vmem:[%s266] sm:$0xf] %v357
        %v361 = vld [vmem:[%s3] sm:$0xf]
        %v362 = vsel %vm286, %v357, 0.0
        %363 = vadd.xlane.f32.xlu0 %v362
        %v364 = vpop.xlane.xlu0 %363
        %v365 = vadd.f32 %v361, %v364
        %vm366 = vcmask 3072
        %367 = vst.msk [vmem:[%s3] sm:$0xf] %vm366, %v365
        %v368 = vld [vmem:[%s4] sm:$0xf]
        %v369 = vmul.f32 %v357, %v357
        %v370 = vsel %vm286, %v369, 0.0
        %371 = vadd.xlane.f32.xlu0 %v370
        %v372 = vpop.xlane.xlu0 %371
        %v373 = vadd.f32 %v368, %v372
        %374 = vst.msk [vmem:[%s4] sm:$0xf] %vm366, %v373
        %p375 = scmp.lt.s32.totalorder %s20, 1
        %s376 = scalar_select %p375, %s20, 1
        %p377 = scmp.lt.s32.totalorder %s21, 1
        %s378 = scalar_select %p377, %s21, 1
        %s379 = smul.addr %s376, 2
        %s380 = sadd.s32 %s378, %s379
        %s381 = smul.addr %s380, 4
        %s382 = scalar_lea.vmem %s2, %s381
        // Predicated region
        $region71: #{conv_forward.2} parent=61 // pred_check
          %p383 = pneg %p97
        $region72: #{conv_forward.2} parent=61 // pred_check_branch
          %385 = sbr.rel (%p383) target = $region74
        $region73: #{conv_forward.2} parent=61 // pred_region
          _
        $region74: #{conv_forward.2} parent=61 // pred_fallthru
          _
        // Predicated region
        $region75: #{conv_forward.2} parent=61 // pred_check
          %p386 = pneg %p118
        $region76: #{conv_forward.2} parent=61 // pred_check_branch
          %388 = sbr.rel (%p386) target = $region78
        $region77: #{conv_forward.2} parent=61 // pred_region
          _
        $region78: #{conv_forward.2} parent=61 // pred_fallthru
          _
        // Predicated region
        $region79: #{conv_forward.2} parent=61 // pred_check
          %p389 = pneg %p139
        $region80: #{conv_forward.2} parent=61 // pred_check_branch
          %391 = sbr.rel (%p389) target = $region82
        $region81: #{conv_forward.2} parent=61 // pred_region
          _
        $region82: #{conv_forward.2} parent=61 // pred_fallthru
          _
        // Predicated region
        $region83: #{conv_forward.2} parent=61 // pred_check
          %p392 = pneg %p118
        $region84: #{conv_forward.2} parent=61 // pred_check_branch
          %394 = sbr.rel (%p392) target = $region86
        $region85: #{conv_forward.2} parent=61 // pred_region
          _
        $region86: #{conv_forward.2} parent=61 // pred_fallthru
          _
        // Predicated region
        $region87: #{conv_forward.2} parent=61 // pred_check
          %p395 = pneg %p139
        $region88: #{conv_forward.2} parent=61 // pred_check_branch
          %397 = sbr.rel (%p395) target = $region90
        $region89: #{conv_forward.2} parent=61 // pred_region
          _
        $region90: #{conv_forward.2} parent=61 // pred_fallthru
          _
      $region62: #{conv_forward.2} parent=5 // pred_fallthru
        _
      %p398 = scmp.le.s32.totalorder 2, %s11
      // Predicated region
      $region91: #{conv_forward.2} parent=5 // pred_check
        %p399 = pneg %p398
      $region92: #{conv_forward.2} parent=5 // pred_check_branch
        %401 = sbr.rel (%p399) target = $region94
      $region93: #{conv_forward.2} parent=5 // pred_region
        %s402 = ssub.s32 %s11, 2
        // Predicated region
        $region95: #{conv_forward.2} parent=93 // pred_check
          %p403 = pneg %p103
        $region96: #{conv_forward.2} parent=93 // pred_check_branch
          %405 = sbr.rel (%p403) target = $region98
        $region97: #{conv_forward.2} parent=93 // pred_region
          %p406 = scmp.lt.s32.totalorder %s22, 1
          %s407 = scalar_select %p406, %s22, 1
          %p408 = scmp.lt.s32.totalorder %s23, 1
          %s409 = scalar_select %p408, %s23, 1
          %s410 = smul.addr %s407, 2
          %s411 = sadd.s32 %s409, %s410
          %s412 = smul.addr %s411, 4
          %s413 = scalar_lea.vmem %s2, %s412
        $region98: #{conv_forward.2} parent=93 // pred_fallthru
          _
      $region94: #{conv_forward.2} parent=5 // pred_fallthru
        _
    $region6: #{conv_forward.2} parent=1 // loop_footer
      %s15 = sadd.s32 1, %s11
    $region7: #{conv_forward.2} parent=1 // loop_footer_branch
      %10 = sbr.rel target = $region3
    $region8: #{conv_forward.2} parent=1 // loop_exit
      _

</llo_original>
